<compile_context>
chip_gen: v7x
topology: tpu7x:2x2x1
jax: 0.10.0
libtpu: 0.0.40
codegen_flags: <defaults>
</compile_context>

<pallas_src>
import functools

import jax
import jax.numpy as jnp
from jax.experimental import pallas as pl
from jax.experimental.pallas import tpu as pltpu


def _contrastive_loss_kernel(y_ref, yp_ref, out_ref, *, margin, inv_two_n):
    y = y_ref[...]          # [R, 128] f32, labels (padding rows/lanes are 1.0)
    yp = yp_ref[...]        # [R, 128] f32, predicted similarity (padding 1.0)

    d_pos = 1.0 - yp
    d_neg = yp - margin
    per_elem = y * (d_pos * d_pos) + (1.0 - y) * (d_neg * d_neg)

    # Two-stage reduction: lanes first (XLU), then sublanes -> (1, 1).
    row = jnp.sum(per_elem, axis=1, keepdims=True)   # [R, 1]
    tot = jnp.sum(row, axis=0, keepdims=True)        # [1, 1]

    out_ref[...] = tot * inv_two_n


def contrastive_loss(y, y_, margin=0.0):
    """Pallas implementation of ContrastiveLoss.forward(y, y_) -> scalar."""
    assert y.shape == y_.shape and y.ndim == 1
    n = y.shape[0]

    # Pad to a whole number of (8, 128) vregs.  Pad value (y=1, y_=1) makes the
    # padded elements contribute exactly zero:  1*(1-1)^2 + 0*(1-m)^2 == 0.
    vreg = 8 * 128
    pad = (-n) % vreg
    y2 = jnp.pad(y.astype(jnp.float32), (0, pad), constant_values=1.0)
    yp2 = jnp.pad(y_.astype(jnp.float32), (0, pad), constant_values=1.0)
    y2 = y2.reshape(-1, 128)     # [R, 128], R a multiple of 8
    yp2 = yp2.reshape(-1, 128)

    kernel = functools.partial(
        _contrastive_loss_kernel,
        margin=float(margin),
        inv_two_n=1.0 / (2.0 * n),
    )

    out = pl.pallas_call(
        kernel,
        # No grid: single invocation, whole arrays resident in VMEM.
        in_specs=[
            pl.BlockSpec(memory_space=pltpu.MemorySpace.VMEM),
            pl.BlockSpec(memory_space=pltpu.MemorySpace.VMEM),
        ],
        out_specs=pl.BlockSpec(memory_space=pltpu.MemorySpace.VMEM),
        out_shape=jax.ShapeDtypeStruct((1, 1), jnp.float32),
    )(y2, yp2)

    return out[0, 0]


if __name__ == "__main__":
    key = jax.random.PRNGKey(0)
    k1, k2 = jax.random.split(key)

    B = 8
    # y: binary (same/different-pair) labels; y_: cosine similarities in [-1, 1].
    y = (jax.random.uniform(k1, (B,)) > 0.5).astype(jnp.float32)
    y_sim = jax.random.uniform(k2, (B,), minval=-1.0, maxval=1.0,
                               dtype=jnp.float32)

    loss = contrastive_loss(y, y_sim)
    jax.block_until_ready(loss)

    # Pure-JAX reference (torch semantics, margin = 0.0).
    margin = 0.0
    ref = jnp.sum(y * (1.0 - y_sim) ** 2
                  + (1.0 - y) * (y_sim - margin) ** 2) / 2.0 / B

    assert jnp.allclose(loss, ref, atol=1e-6, rtol=1e-6), (loss, ref)
    print("KERNEL_OK")
</pallas_src>

<mosaic_0001>
module attributes {stable_mosaic.version = 11 : i64} {
  func.func @_contrastive_loss_kernel(%arg0: memref<8x128xf32, #tpu.memory_space<vmem>>, %arg1: memref<8x128xf32, #tpu.memory_space<vmem>>, %arg2: memref<1x1xf32, #tpu.memory_space<vmem>>) attributes {dimension_semantics = [], scalar_prefetch = 0 : i64, scratch_operands = 0 : i64, tpu.core_type = #tpu.core_type<tc>} {
    %c0 = arith.constant 0 : index
    %c0_0 = arith.constant 0 : index
    %0 = vector.load %arg0[%c0, %c0_0] : memref<8x128xf32, #tpu.memory_space<vmem>>, vector<8x128xf32>
    %c0_1 = arith.constant 0 : index
    %c0_2 = arith.constant 0 : index
    %1 = vector.load %arg1[%c0_1, %c0_2] : memref<8x128xf32, #tpu.memory_space<vmem>>, vector<8x128xf32>
    %cst = arith.constant 1.000000e+00 : f32
    %2 = vector.broadcast %cst : f32 to vector<8x128xf32>
    %3 = arith.subf %2, %1 : vector<8x128xf32>
    %cst_3 = arith.constant 0.000000e+00 : f32
    %4 = vector.broadcast %cst_3 : f32 to vector<8x128xf32>
    %5 = arith.subf %1, %4 : vector<8x128xf32>
    %6 = arith.mulf %3, %3 : vector<8x128xf32>
    %7 = arith.mulf %0, %6 : vector<8x128xf32>
    %cst_4 = arith.constant 1.000000e+00 : f32
    %8 = vector.broadcast %cst_4 : f32 to vector<8x128xf32>
    %9 = arith.subf %8, %0 : vector<8x128xf32>
    %10 = arith.mulf %5, %5 : vector<8x128xf32>
    %11 = arith.mulf %9, %10 : vector<8x128xf32>
    %12 = arith.addf %7, %11 : vector<8x128xf32>
    %cst_5 = arith.constant dense<0.000000e+00> : vector<8xf32>
    %13 = vector.multi_reduction <add>, %12, %cst_5 [1] : vector<8x128xf32> to vector<8xf32>
    %14 = vector.shape_cast %13 : vector<8xf32> to vector<8x1xf32>
    %cst_6 = arith.constant dense<0.000000e+00> : vector<1xf32>
    %15 = vector.multi_reduction <add>, %14, %cst_6 [0] : vector<8x1xf32> to vector<1xf32>
    %16 = vector.shape_cast %15 : vector<1xf32> to vector<1x1xf32>
    %cst_7 = arith.constant 6.250000e-02 : f32
    %17 = vector.broadcast %cst_7 : f32 to vector<1x1xf32>
    %18 = arith.mulf %16, %17 : vector<1x1xf32>
    %c0_8 = arith.constant 0 : index
    %c0_9 = arith.constant 0 : index
    %19 = vector.load %arg2[%c0_8, %c0_9] : memref<1x1xf32, #tpu.memory_space<vmem>>, vector<1x1xf32>
    tpu.vector_store %arg2[%c0_8, %c0_9], %18 {strides = array<i32>} : memref<1x1xf32, #tpu.memory_space<vmem>>, vector<1x1xf32>,
    return
  }
}

</mosaic_0001>

<llo_original>
// kernel: tpu_custom_call.1
$region0: #{tpu_custom_call.1}
  #allocation0 [shape = 'u32[]', space=smem, size = 0x4, offset = 0x4, fixed_abs, tag = 'smem constant byte address 0x4 - core index']
  #allocation1 [shape = 'u32[144,128]{1,0:T(1,128)}', space=vmem, size = 0x12000, scoped, tag = 'internal scratch']
  %s0 = inlined_call_operand.hbm [shape: f32[8,128], index: 0, kind: input, shape index: {}]
  %s1 = inlined_call_operand.hbm [shape: f32[8,128], index: 1, kind: input, shape index: {}]
  %s2 = inlined_call_operand.hbm [shape: f32[1,1], index: 2, kind: output, shape index: {}]
  %s3 = sld [smem:[#allocation0]]
  $region26: #{tpu_custom_call.1} parent=0
    _
  %s5 = ssub.s32 1, %s3
  %s6 = scalar_select 0, %s5, %s3
  $region1: #{tpu_custom_call.1} parent=0
    #allocation2 [shape = 'u8[4096]{0}', space=vmem, size = 0x1000, scoped, tag = 'input window, operand 0, single buffered']
    #allocation3 [shape = 's32[1]{0}', space=sflag, size = 0x4, scoped, tag = 'scoped memory for tpu_custom_call.1']
    #allocation4 [shape = 's32[1]{0}', space=sflag, size = 0x4, scoped, tag = 'scoped memory for tpu_custom_call.1']
    #allocation5 [shape = 'u8[4096]{0}', space=vmem, size = 0x1000, scoped, tag = 'input window, operand 1, single buffered']
    #allocation6 [shape = 's32[1]{0}', space=sflag, size = 0x4, scoped, tag = 'scoped memory for tpu_custom_call.1']
    #allocation7 [shape = 'u8[512]{0}', space=vmem, size = 0x400, scoped, tag = 'output window, operand 0, single buffered']
    %7 = vsyncpa [#allocation3], 0
    %8 = vsyncpa [#allocation6], 0
    %9 = vsyncpa [#allocation4], 0
    // Predicated region
    $region2: #{tpu_custom_call.1} parent=1 // pred_check
      _
    $region3: #{tpu_custom_call.1} parent=1 // pred_check_branch
      %11 = sbr.rel (0) target = $region5
    $region4: #{tpu_custom_call.1} parent=1 // pred_region
      %s13 = ssub.s32 128, 128
      %14 = vsyncadd [#allocation3], %s13
      %s16 = sshll.u32 [#allocation2], 4
      %s17 = int_to_ptr.vmem [resolvable:$true] %s16
      %19 = dma.hbm_to_vmem [thread:$0]  %s0, 128, %s17, [#allocation3]
    $region5: #{tpu_custom_call.1} parent=1 // pred_fallthru
      _
    // Predicated region
    $region6: #{tpu_custom_call.1} parent=1 // pred_check
      _
    $region7: #{tpu_custom_call.1} parent=1 // pred_check_branch
      %21 = sbr.rel (0) target = $region9
    $region8: #{tpu_custom_call.1} parent=1 // pred_region
      %s23 = ssub.s32 128, 128
      %24 = vsyncadd [#allocation6], %s23
      %s26 = sshll.u32 [#allocation5], 4
      %s27 = int_to_ptr.vmem [resolvable:$true] %s26
      %29 = dma.hbm_to_vmem [thread:$0]  %s1, 128, %s27, [#allocation6]
    $region9: #{tpu_custom_call.1} parent=1 // pred_fallthru
      _
    // Predicated region
    $region10: #{tpu_custom_call.1} parent=1 // pred_check
      _
    $region11: #{tpu_custom_call.1} parent=1 // pred_check_branch
      %31 = sbr.rel (0) target = $region13
    $region12: #{tpu_custom_call.1} parent=1 // pred_region
      %32 = dma.done [#allocation3], 128
    $region13: #{tpu_custom_call.1} parent=1 // pred_fallthru
      _
    // Predicated region
    $region14: #{tpu_custom_call.1} parent=1 // pred_check
      _
    $region15: #{tpu_custom_call.1} parent=1 // pred_check_branch
      %34 = sbr.rel (0) target = $region17
    $region16: #{tpu_custom_call.1} parent=1 // pred_region
      %35 = dma.done [#allocation6], 128
    $region17: #{tpu_custom_call.1} parent=1 // pred_fallthru
      _
    %v36 = vld [vmem:[#allocation2] sm:$0xff]
    %v37 = vld [vmem:[#allocation5] sm:$0xff]
    %v38 = vsub.f32 1.0, %v37
    %v39 = vmul.f32 %v38, %v38
    %v40 = vmul.f32 %v36, %v39
    %v41 = vsub.f32 1.0, %v36
    %v42 = vmul.f32 %v37, %v37
    %v43 = vmul.f32 %v41, %v42
    %v44 = vadd.f32 %v40, %v43
    %45 = vadd.xlane.f32.xlu0 %v44
    %v46 = vpop.xlane.xlu0 %45
    %v47 = vrot.slane %v46, 4
    %v48 = vadd.f32 %v46, %v47
    %v49 = vrot.slane %v48, 2
    %v50 = vadd.f32 %v48, %v49
    %v51 = vrot.slane %v50, 1
    %v52 = vadd.f32 %v50, %v51
    %v53 = vmul.f32 %v52, 0.0625
    %vm54 = vcmask 0
    %55 = vst.msk [vmem:[#allocation7] sm:$0x1] %vm54, %v53
    // Predicated region
    $region18: #{tpu_custom_call.1} parent=1 // pred_check
      _
    $region19: #{tpu_custom_call.1} parent=1 // pred_check_branch
      %57 = sbr.rel (0) target = $region21
    $region20: #{tpu_custom_call.1} parent=1 // pred_region
      %s59 = ssub.s32 16, 16
      %60 = vsyncadd [#allocation4], %s59
      %s62 = sshll.u32 [#allocation7], 4
      %s63 = int_to_ptr.vmem [resolvable:$true] %s62
      %65 = dma.vmem_to_hbm [thread:$0]  %s63, 16, %s2, [#allocation4]
    $region21: #{tpu_custom_call.1} parent=1 // pred_fallthru
      _
    // Predicated region
    $region22: #{tpu_custom_call.1} parent=1 // pred_check
      _
    $region23: #{tpu_custom_call.1} parent=1 // pred_check_branch
      %67 = sbr.rel (0) target = $region25
    $region24: #{tpu_custom_call.1} parent=1 // pred_region
      %68 = dma.done [#allocation4], 16
    $region25: #{tpu_custom_call.1} parent=1 // pred_fallthru
      _
    %69 = vsyncpa [#allocation3], 1
    %70 = vsyncpa [#allocation6], 1
    %71 = vsyncpa [#allocation4], 1

</llo_original>
